<compile_context>
chip_gen: v7x
topology: tpu7x:2x2x1
jax: 0.10.0
libtpu: 0.0.40
codegen_flags: <defaults>
</compile_context>

<pallas_src>
import math
from functools import partial

import jax
import jax.numpy as jnp
from jax import lax
from jax.experimental import pallas as pl
from jax.experimental.pallas import tpu as pltpu


# ----------------------------------------------------------------------------
# Kernel
# ----------------------------------------------------------------------------
def _sim_kernel(q_ref, memt_ref, out_ref, *, inv_T):
    # q_ref:    (B, D)   resident block (constant index_map across the grid)
    # memt_ref: (D, TN)  lane-dense tile of the transposed memory bank
    # out_ref:  (B, TN)  lane-dense output tile
    sims = lax.dot_general(
        q_ref[...],
        memt_ref[...],
        dimension_numbers=(((1,), (0,)), ((), ())),   # canonical (M,K)x(K,N)
        preferred_element_type=jnp.float32,           # f32 MXU accumulation
    )
    out_ref[...] = (sims * inv_T).astype(out_ref.dtype)


# ----------------------------------------------------------------------------
# Generation-aware tiling / VMEM budgeting
# ----------------------------------------------------------------------------
def _round_up(x, m):
    return ((x + m - 1) // m) * m


_VMEM_CAP = None


def _vmem_capacity_bytes():
    """Physical VMEM per core (128 MiB on v5e/v6e, 64 MiB on v7x)."""
    global _VMEM_CAP
    if _VMEM_CAP is None:
        try:
            _VMEM_CAP = int(pltpu.get_tpu_info().vmem_capacity_bytes)
        except Exception:
            _VMEM_CAP = 64 << 20          # conservative fallback (v7x-sized)
    return _VMEM_CAP


def _default_tile_n():
    # Bigger default tiles where VMEM allows (v5e/v6e: 128 MiB); 4096 on v7x.
    return 8192 if _vmem_capacity_bytes() >= (96 << 20) else 4096


def _vmem_bytes(B, D, tile_n, q_isz, mem_isz, out_isz, mem_buffers=2):
    # Bank tile is (D, TN): D on sublanes (packing-safe bound 32), TN on lanes.
    Dp_lane = _round_up(max(D, 128), 128)        # q's feature axis (lanes)
    Dp_sub = _round_up(max(D, 8), 32)            # bank's feature axis (sublanes)
    Bp = _round_up(max(B, 8), 8)
    Tn = _round_up(max(tile_n, 128), 128)
    mem_tile = Dp_sub * Tn * mem_isz
    out_tile = Bp * Tn * out_isz
    q_blk = Bp * Dp_lane * q_isz
    return mem_buffers * mem_tile + 2 * out_tile + 2 * q_blk


def _choose_tile_n(Q, requested, B, D, q_isz, mem_isz, out_isz, mem_buffers,
                   budget):
    Q128 = _round_up(Q, 128)
    req = max(128, (int(requested) // 128) * 128)

    # Single-tile fast path: whole bank in one exact-extent block (no masking).
    if Q128 <= req and _vmem_bytes(B, D, Q128, q_isz, mem_isz, out_isz,
                                   mem_buffers) <= budget:
        return Q

    # Multi-tile path: lane-dense multiples of 128.
    t = max(128, (min(req, Q128) // 128) * 128)
    # Keep >= ~8 grid steps (>= 4 per v7x TensorCore) so the bank DMA overlaps
    # compute, but never shrink tiles below 1024 (per-step overhead ~0.35 us).
    steps_cap = max(1024, ((Q128 // 8) // 128) * 128)
    t = min(t, steps_cap)
    # Shrink until the multi-buffered working set fits the VMEM budget.
    while t > 128 and _vmem_bytes(B, D, t, q_isz, mem_isz, out_isz,
                                  mem_buffers) > budget:
        t = max(128, ((t // 2) // 128) * 128)
    return t


# ----------------------------------------------------------------------------
# Pallas wrapper (works eagerly and under jit; all tiling decisions static)
# ----------------------------------------------------------------------------
def sample_similarities_fwd(q, memory_t, T, *, tile_n=None,
                            out_dtype=jnp.float32, mem_buffers=None):
    """out[b, k] = <q[b], memory_t[:, k]> / T  -> (batch, queueSize).

    memory_t is the bank stored TRANSPOSED, shape (feats_dim, queueSize).
    """
    B, D = q.shape
    Dm, Q = memory_t.shape
    assert D == Dm, "q and memory feature dims must match"

    # bf16 bank -> bf16 MXU operands; accumulation stays f32.
    if q.dtype != memory_t.dtype:
        q = q.astype(memory_t.dtype)

    out_dtype = jnp.dtype(out_dtype)
    nbuf = 2 if mem_buffers is None else max(2, int(mem_buffers))

    cap = _vmem_capacity_bytes()
    budget = int(0.70 * cap)
    if tile_n is None or int(tile_n) <= 0:
        tile_n = _default_tile_n()
    tile_n = _choose_tile_n(Q, tile_n, B, D, q.dtype.itemsize,
                            memory_t.dtype.itemsize, out_dtype.itemsize,
                            nbuf, budget)

    n_tiles = pl.cdiv(Q, tile_n)
    est = _vmem_bytes(B, D, tile_n, q.dtype.itemsize, memory_t.dtype.itemsize,
                      out_dtype.itemsize, nbuf)
    vmem_limit = int(min(max(est + (8 << 20), 32 << 20),
                         max(32 << 20, int(0.85 * cap))))

    mem_spec_kwargs = {}
    if mem_buffers is not None and nbuf != 2 and n_tiles > nbuf:
        # Optional deeper pipelining; sweep if xprof shows exposed DMA.
        mem_spec_kwargs["pipeline_mode"] = pl.Buffered(nbuf)

    kernel = partial(_sim_kernel, inv_T=float(1.0 / T))

    return pl.pallas_call(
        kernel,
        out_shape=jax.ShapeDtypeStruct((B, Q), out_dtype),
        grid_spec=pltpu.PrefetchScalarGridSpec(
            num_scalar_prefetch=0,
            grid=(n_tiles,),
            in_specs=[
                pl.BlockSpec((B, D), lambda j: (0, 0)),            # q: resident
                pl.BlockSpec((D, tile_n), lambda j: (0, j),        # bank tile
                             **mem_spec_kwargs),
            ],
            out_specs=pl.BlockSpec((B, tile_n), lambda j: (0, j)),
        ),
        compiler_params=pltpu.CompilerParams(
            dimension_semantics=("parallel",),
            vmem_limit_bytes=vmem_limit,
        ),
    )(q, memory_t)


# ----------------------------------------------------------------------------
# Jitted forward: similarities + (optional) ring-buffer update, bank donated
# ----------------------------------------------------------------------------
@partial(jax.jit,
         static_argnames=("T", "tile_n", "out_dtype", "update", "mem_buffers"),
         donate_argnames=("memory_t",))
def _forward_jit(q_sim, q_new, memory_t, index, *, T, tile_n, out_dtype,
                 update, mem_buffers):
    # Similarities use the pre-update bank (torch clones the queue first).
    out = sample_similarities_fwd(q_sim, memory_t, T, tile_n=tile_n,
                                  out_dtype=out_dtype, mem_buffers=mem_buffers)
    if update:
        Q = memory_t.shape[1]
        B = q_new.shape[0]
        ids = (jnp.arange(B, dtype=jnp.int32)
               + jnp.asarray(index, dtype=jnp.int32)) % Q
        memory_t = memory_t.at[:, ids].set(
            lax.stop_gradient(q_new).astype(memory_t.dtype).T)
    return out, memory_t


# ----------------------------------------------------------------------------
# Module (JAX/Pallas port of loss/CompRess.py::SampleSimilarities)
# ----------------------------------------------------------------------------
class SampleSimilaritiesJAX:

    def __init__(self, feats_dim, queueSize, T, key,
                 memory_dtype=jnp.bfloat16, out_dtype=jnp.float32,
                 tile_n=None, mem_buffers=None, verbose=False):
        self.inputSize = feats_dim
        self.queueSize = queueSize
        self.T = float(T)
        self.index = 0
        self.tile_n = tile_n
        self.mem_buffers = mem_buffers
        self.out_dtype = jnp.dtype(out_dtype).name
        _vmem_capacity_bytes()                 # prime the HW-info cache eagerly
        stdv = 1.0 / math.sqrt(feats_dim / 3)
        # torch.rand(Q, D).mul_(2*stdv).add_(-stdv) -> uniform in [-stdv, stdv).
        # Stored TRANSPOSED (D, Q): lane-dense tiles along the queue axis.
        self.memory_t = jax.random.uniform(
            key, (feats_dim, queueSize), dtype=jnp.float32,
            minval=-stdv, maxval=stdv,
        ).astype(memory_dtype)
        if verbose:
            print('[CompRess]: using a memory bank with shape: ({},{})'.format(
                queueSize, feats_dim))

    @property
    def memory(self):
        # (queueSize, feats_dim) view, matching the torch buffer layout.
        return self.memory_t.T

    def forward(self, q, update=True):
        batchSize = q.shape[0]
        out, self.memory_t = _forward_jit(
            q, q, self.memory_t, self.index,
            T=self.T, tile_n=self.tile_n, out_dtype=self.out_dtype,
            update=bool(update), mem_buffers=self.mem_buffers)
        if update:
            self.index = (self.index + batchSize) % self.queueSize
        if batchSize == 1:                      # torch .squeeze()
            out = jnp.squeeze(out)
        return out

    def forward_pair(self, q_a, q_b, update=True):
        """Fused teacher+student similarities: the bank is streamed from HBM
        once and the MXU M dimension is doubled. When update=True the ring
        buffer is updated with q_a (teacher features), matching CompRess."""
        Ba = q_a.shape[0]
        q_cat = jnp.concatenate([q_a, q_b], axis=0)
        out, self.memory_t = _forward_jit(
            q_cat, q_a, self.memory_t, self.index,
            T=self.T, tile_n=self.tile_n, out_dtype=self.out_dtype,
            update=bool(update), mem_buffers=self.mem_buffers)
        if update:
            self.index = (self.index + Ba) % self.queueSize
        return out[:Ba], out[Ba:]


# ----------------------------------------------------------------------------
# Self-test
# ----------------------------------------------------------------------------
if __name__ == "__main__":
    key = jax.random.PRNGKey(0)
    k_mem, k_q, k_q2 = jax.random.split(key, 3)

    feats_dim = 32
    queueSize = 320          # NOT a multiple of 128 -> exercises the exact
                             # single-tile path AND the ragged multi-tile path
    batch = 8
    T = 0.07

    q = jax.random.normal(k_q, (batch, feats_dim), dtype=jnp.float32)
    q = q / jnp.linalg.norm(q, axis=-1, keepdims=True)
    q2 = jax.random.normal(k_q2, (batch, feats_dim), dtype=jnp.float32)
    q2 = q2 / jnp.linalg.norm(q2, axis=-1, keepdims=True)

    # --- float32 bank: exact parity with the torch module -------------------
    mod = SampleSimilaritiesJAX(feats_dim, queueSize, T, k_mem,
                                memory_dtype=jnp.float32)
    mem_before = jnp.asarray(mod.memory)                 # pre-update copy
    out = jax.block_until_ready(mod.forward(q, update=True))
    ref = (q @ mem_before.T) / T
    assert out.shape == (batch, queueSize)
    assert jnp.allclose(out, ref, atol=1e-4, rtol=1e-4)
    assert jnp.allclose(mod.memory[:batch], q, atol=1e-6)
    assert int(mod.index) == batch % queueSize

    # --- fused teacher/student pair (bank read from HBM once) ---------------
    mem_now = jnp.asarray(mod.memory)
    out_a, out_b = mod.forward_pair(q, q2, update=False)
    out_a = jax.block_until_ready(out_a)
    assert jnp.allclose(out_a, (q @ mem_now.T) / T, atol=1e-4, rtol=1e-4)
    assert jnp.allclose(out_b, (q2 @ mem_now.T) / T, atol=1e-4, rtol=1e-4)

    # --- forced small tile: multi-tile grid with a ragged last tile ---------
    mod_tiled = SampleSimilaritiesJAX(feats_dim, queueSize, T, k_mem,
                                      memory_dtype=jnp.float32, tile_n=128)
    mem_t0 = jnp.asarray(mod_tiled.memory)
    out_t = jax.block_until_ready(mod_tiled.forward(q, update=False))
    assert jnp.allclose(out_t, (q @ mem_t0.T) / T, atol=1e-4, rtol=1e-4)

    # --- default bf16 bank (halves the dominant HBM stream) -----------------
    mod_bf16 = SampleSimilaritiesJAX(feats_dim, queueSize, T, k_mem)
    mem_bf = jnp.asarray(mod_bf16.memory).astype(jnp.float32)
    out_bf = jax.block_until_ready(mod_bf16.forward(q, update=False))
    ref_bf = (q.astype(jnp.bfloat16).astype(jnp.float32) @ mem_bf.T) / T
    assert out_bf.shape == (batch, queueSize)
    assert jnp.allclose(out_bf, ref_bf, atol=5e-2, rtol=5e-2)

    print("KERNEL_OK")
</pallas_src>

<mosaic_0001>
module attributes {stable_mosaic.version = 11 : i64} {
  func.func @_sim_kernel(%arg0: i32, %arg1: memref<8x32xf32, #tpu.memory_space<vmem>>, %arg2: memref<32x320xf32, #tpu.memory_space<vmem>>, %arg3: memref<8x320xf32, #tpu.memory_space<vmem>>) attributes {dimension_semantics = [#tpu.dimension_semantics<parallel>], iteration_bounds = array<i64: 1>, scalar_prefetch = 0 : i64, scratch_operands = 0 : i64, tpu.core_type = #tpu.core_type<tc>, window_params = [{pipeline_mode = #tpu.pipeline_mode<synchronous>, transform_indices = @transform_0, window_bounds = array<i64: 8, 32>}, {transform_indices = @transform_1, window_bounds = array<i64: 32, 320>}, {transform_indices = @transform_2, window_bounds = array<i64: 8, 320>}]} {
    %c0 = arith.constant 0 : index
    %c0_0 = arith.constant 0 : index
    %0 = vector.load %arg1[%c0, %c0_0] : memref<8x32xf32, #tpu.memory_space<vmem>>, vector<8x32xf32>
    %c0_1 = arith.constant 0 : index
    %c0_2 = arith.constant 0 : index
    %1 = vector.load %arg2[%c0_1, %c0_2] : memref<32x320xf32, #tpu.memory_space<vmem>>, vector<32x320xf32>
    %cst = arith.constant dense<0.000000e+00> : vector<8x320xf32>
    %2 = tpu.matmul %0, %1, %cst {dimension_numbers = #tpu.dot_dimension_numbers<[1], [0], [0], [1], [0, 0, 1, 1], [], []>} : vector<8x32xf32>, vector<32x320xf32>, vector<8x320xf32> -> vector<8x320xf32>
    %cst_3 = arith.constant 14.2857141 : f32
    %3 = vector.broadcast %cst_3 : f32 to vector<8x320xf32>
    %4 = arith.mulf %2, %3 : vector<8x320xf32>
    %c0_4 = arith.constant 0 : index
    %c0_5 = arith.constant 0 : index
    %5 = vector.load %arg3[%c0_4, %c0_5] : memref<8x320xf32, #tpu.memory_space<vmem>>, vector<8x320xf32>
    tpu.vector_store %arg3[%c0_4, %c0_5], %4 {strides = array<i32>} : memref<8x320xf32, #tpu.memory_space<vmem>>, vector<8x320xf32>,
    return
  }
  func.func @transform_0(%arg0: i32) -> (i32, i32) {
    %c0_i32 = arith.constant 0 : i32
    %c0_i32_0 = arith.constant 0 : i32
    %c0_i32_1 = arith.constant 0 : i32
    return %c0_i32, %c0_i32_0 : i32, i32
  }
  func.func @transform_1(%arg0: i32) -> (i32, i32) {
    %c0_i32 = arith.constant 0 : i32
    %c0_i32_0 = arith.constant 0 : i32
    return %c0_i32, %arg0 : i32, i32
  }
  func.func @transform_2(%arg0: i32) -> (i32, i32) {
    %c0_i32 = arith.constant 0 : i32
    %c0_i32_0 = arith.constant 0 : i32
    return %c0_i32, %arg0 : i32, i32
  }
}

</mosaic_0001>

<llo_original>
// kernel: _forward_jit.1
$region0: #{_forward_jit.1}
  #allocation0 [shape = 'u32[]', space=smem, size = 0x4, offset = 0x4, fixed_abs, tag = 'smem constant byte address 0x4 - core index']
  #allocation1 [shape = 'u32[144,128]{1,0:T(1,128)}', space=vmem, size = 0x12000, scoped, tag = 'internal scratch']
  %s0 = inlined_call_operand.hbm [shape: f32[8,32], index: 0, kind: input, shape index: {}]
  %s1 = inlined_call_operand.hbm [shape: f32[32,320], index: 1, kind: input, shape index: {}]
  %s2 = inlined_call_operand.hbm [shape: f32[8,320], index: 2, kind: output, shape index: {}]
  %s3 = sld [smem:[#allocation0]]
  $region26: #{_forward_jit.1} parent=0
    _
  %s5 = ssub.s32 1, %s3
  %s6 = scalar_select 0, %s5, %s3
  $region1: #{_forward_jit.1} parent=0
    #allocation2 [shape = 'u8[4096]{0}', space=vmem, size = 0x1000, scoped, tag = 'input window, operand 0, single buffered']
    #allocation3 [shape = 's32[1]{0}', space=sflag, size = 0x4, scoped, tag = 'scoped memory for _forward_jit.1']
    #allocation4 [shape = 's32[1]{0}', space=sflag, size = 0x4, scoped, tag = 'scoped memory for _forward_jit.1']
    #allocation5 [shape = 'u8[49152]{0}', space=vmem, size = 0xc000, scoped, tag = 'input window, operand 1, single buffered']
    #allocation6 [shape = 's32[1]{0}', space=sflag, size = 0x4, scoped, tag = 'scoped memory for _forward_jit.1']
    #allocation7 [shape = 'u8[12288]{0}', space=vmem, size = 0x3000, scoped, tag = 'output window, operand 0, single buffered']
    %7 = vsyncpa [#allocation3], 0
    %8 = vsyncpa [#allocation6], 0
    %9 = vsyncpa [#allocation4], 0
    // Predicated region
    $region2: #{_forward_jit.1} parent=1 // pred_check
      _
    $region3: #{_forward_jit.1} parent=1 // pred_check_branch
      %11 = sbr.rel (0) target = $region5
    $region4: #{_forward_jit.1} parent=1 // pred_region
      %s13 = ssub.s32 128, 128
      %14 = vsyncadd [#allocation3], %s13
      %s16 = sshll.u32 [#allocation2], 4
      %s17 = int_to_ptr.vmem [resolvable:$true] %s16
      %19 = dma.hbm_to_vmem [thread:$0]  %s0, 128, %s17, [#allocation3]
    $region5: #{_forward_jit.1} parent=1 // pred_fallthru
      _
    // Predicated region
    $region6: #{_forward_jit.1} parent=1 // pred_check
      _
    $region7: #{_forward_jit.1} parent=1 // pred_check_branch
      %21 = sbr.rel (0) target = $region9
    $region8: #{_forward_jit.1} parent=1 // pred_region
      %s23 = ssub.s32 1536, 1536
      %24 = vsyncadd [#allocation6], %s23
      %s25 = sshll.u32 [#allocation5], 4
      %s26 = int_to_ptr.vmem [resolvable:$true] %s25
      %31 = dma.hbm_to_vmem [thread:$0]  %s1, 1536, %s26, [#allocation6], 384, 384, 24
    $region9: #{_forward_jit.1} parent=1 // pred_fallthru
      _
    // Predicated region
    $region10: #{_forward_jit.1} parent=1 // pred_check
      _
    $region11: #{_forward_jit.1} parent=1 // pred_check_branch
      %33 = sbr.rel (0) target = $region13
    $region12: #{_forward_jit.1} parent=1 // pred_region
      %34 = dma.done [#allocation3], 128
    $region13: #{_forward_jit.1} parent=1 // pred_fallthru
      _
    // Predicated region
    $region14: #{_forward_jit.1} parent=1 // pred_check
      _
    $region15: #{_forward_jit.1} parent=1 // pred_check_branch
      %36 = sbr.rel (0) target = $region17
    $region16: #{_forward_jit.1} parent=1 // pred_region
      %37 = dma.done [#allocation6], 1536
    $region17: #{_forward_jit.1} parent=1 // pred_fallthru
      _
    %v38 = vld [vmem:[#allocation2] sm:$0xff]
    %v39 = vld [vmem:[#allocation5] sm:$0xff]
    %v40 = vld [vmem:[#allocation5 + $0x8] sm:$0xff]
    %v41 = vld [vmem:[#allocation5 + $0x10] sm:$0xff]
    %v42 = vld [vmem:[#allocation5 + $0x18] sm:$0xff]
    %v43 = vld [vmem:[#allocation5 + $0x20] sm:$0xff]
    %v44 = vld [vmem:[#allocation5 + $0x28] sm:$0xff]
    %v45 = vld [vmem:[#allocation5 + $0x30] sm:$0xff]
    %v46 = vld [vmem:[#allocation5 + $0x38] sm:$0xff]
    %v47 = vld [vmem:[#allocation5 + $0x40] sm:$0xff]
    %v48 = vld [vmem:[#allocation5 + $0x48] sm:$0xff]
    %v49 = vld [vmem:[#allocation5 + $0x50] sm:$0xff]
    %v50 = vld [vmem:[#allocation5 + $0x58] sm:$0xff]
    %vm51 = vcmask 261120
    %v53 = vsel %vm51, %v38, 0
    %55 = vmatprep.subr.mxu0 %v40
    %56 = vmatpush1.msra.mxu0 %v39
    %57 = vmatprep.subr.mxu0 %v43
    %58 = vmatpush1.msra.mxu0 %v42
    %59 = vmatprep.subr.mxu0 %v46
    %60 = vmatpush1.msra.mxu0 %v45
    %61 = vmatprep.subr.mxu0 %v49
    %62 = vmatpush1.msra.mxu0 %v48
    %63 = vmatprep.subr.mxu0 0.0
    %64 = vmatpush1.msra.mxu0 0.0
    %65 = vmatprep.subr.mxu0 0.0
    %66 = vmatpush1.msra.mxu0 0.0
    %67 = vmatprep.subr.mxu0 0.0
    %68 = vmatpush1.msra.mxu0 0.0
    %69 = vmatprep.subr.mxu0 0.0
    %70 = vmatpush1.msra.mxu0 0.0
    %71 = vmatprep.subr.mxu0 0.0
    %72 = vmatpush1.msra.mxu0 0.0
    %73 = vmatprep.subr.mxu0 0.0
    %74 = vmatpush1.msra.mxu0 0.0
    %75 = vmatprep.subr.mxu0 0.0
    %76 = vmatpush1.msra.mxu0 0.0
    %77 = vmatprep.subr.mxu0 0.0
    %78 = vmatpush1.msra.mxu0 0.0
    %79 = vmatprep.subr.mxu0 0.0
    %80 = vmatpush1.msra.mxu0 0.0
    %81 = vmatprep.subr.mxu0 0.0
    %82 = vmatpush1.msra.mxu0 0.0
    %83 = vmatprep.subr.mxu0 0.0
    %84 = vmatpush1.msra.mxu0 0.0
    %85 = vmatprep.subr.mxu0 0.0
    %86 = vmatpush1.msra.mxu0 0.0
    %87 = vmatprep.subr.mxu0 0.0
    %88 = vmatpush1.msra.mxu0 0.0
    %89 = vmatprep.subr.mxu0 0.0
    %90 = vmatpush1.msra.mxu0 0.0
    %91 = vmatprep.subr.mxu0 0.0
    %92 = vmatpush1.msra.mxu0 0.0
    %93 = vmatprep.subr.mxu0 0.0
    %94 = vmatpush1.msra.mxu0 0.0
    %95 = vmatprep.subr.mxu0 0.0
    %96 = vmatpush1.msra.mxu0 0.0
    %97 = vmatprep.subr.mxu0 0.0
    %98 = vmatpush1.msra.mxu0 0.0
    %99 = vmatprep.subr.mxu0 0.0
    %100 = vmatpush1.msra.mxu0 0.0
    %101 = vmatprep.subr.mxu0 0.0
    %102 = vmatpush1.msra.mxu0 0.0
    %103 = vmatprep.subr.mxu0 0.0
    %104 = vmatpush1.msra.mxu0 0.0
    %105 = vmatprep.subr.mxu0 0.0
    %106 = vmatpush1.msra.mxu0 0.0
    %107 = vmatprep.subr.mxu0 0.0
    %108 = vmatpush1.msra.mxu0 0.0
    %109 = vmatprep.subr.mxu0 0.0
    %110 = vmatpush1.msra.mxu0 0.0
    %111 = vmatprep.subr.mxu0 0.0
    %112 = vmatpush1.msra.mxu0 0.0
    %113 = vmatprep.subr.mxu0 0.0
    %114 = vmatpush1.msra.mxu0 0.0
    %115 = vmatprep.subr.mxu0 0.0
    %116 = vmatpush1.msra.mxu0 0.0
    %117 = vmatprep.subr.mxu0 0.0
    %118 = vmatpush1.msra.mxu0 0.0
    %119 = vmatprep.mubr.f32.mxu0 0.0
    %120 = vmatmul.mubr.f32.gmra.mrb[0].mxu0 %v53
    %v121 = vpop.f32.mrb[0].mxu0
    %v122 = vadd.f32 0.0, %v121
    %v123 = vpop.f32.mrb[0].mxu0
    %v124 = vadd.f32 0.0, %v123
    %125 = vdwg.mxu0
    %126 = vmatprep.subr.mxu0 0.0
    %127 = vmatpush1.msra.mxu0 %v41
    %128 = vmatprep.subr.mxu0 0.0
    %129 = vmatpush1.msra.mxu0 %v44
    %130 = vmatprep.subr.mxu0 0.0
    %131 = vmatpush1.msra.mxu0 %v47
    %132 = vmatprep.subr.mxu0 0.0
    %133 = vmatpush1.msra.mxu0 %v50
    %134 = vmatprep.subr.mxu0 0.0
    %135 = vmatpush1.msra.mxu0 0.0
    %136 = vmatprep.subr.mxu0 0.0
    %137 = vmatpush1.msra.mxu0 0.0
    %138 = vmatprep.subr.mxu0 0.0
    %139 = vmatpush1.msra.mxu0 0.0
    %140 = vmatprep.subr.mxu0 0.0
    %141 = vmatpush1.msra.mxu0 0.0
    %142 = vmatprep.subr.mxu0 0.0
    %143 = vmatpush1.msra.mxu0 0.0
    %144 = vmatprep.subr.mxu0 0.0
    %145 = vmatpush1.msra.mxu0 0.0
    %146 = vmatprep.subr.mxu0 0.0
    %147 = vmatpush1.msra.mxu0 0.0
    %148 = vmatprep.subr.mxu0 0.0
    %149 = vmatpush1.msra.mxu0 0.0
    %150 = vmatprep.subr.mxu0 0.0
    %151 = vmatpush1.msra.mxu0 0.0
    %152 = vmatprep.subr.mxu0 0.0
    %153 = vmatpush1.msra.mxu0 0.0
    %154 = vmatprep.subr.mxu0 0.0
    %155 = vmatpush1.msra.mxu0 0.0
    %156 = vmatprep.subr.mxu0 0.0
    %157 = vmatpush1.msra.mxu0 0.0
    %158 = vmatprep.subr.mxu0 0.0
    %159 = vmatpush1.msra.mxu0 0.0
    %160 = vmatprep.subr.mxu0 0.0
    %161 = vmatpush1.msra.mxu0 0.0
    %162 = vmatprep.subr.mxu0 0.0
    %163 = vmatpush1.msra.mxu0 0.0
    %164 = vmatprep.subr.mxu0 0.0
    %165 = vmatpush1.msra.mxu0 0.0
    %166 = vmatprep.subr.mxu0 0.0
    %167 = vmatpush1.msra.mxu0 0.0
    %168 = vmatprep.subr.mxu0 0.0
    %169 = vmatpush1.msra.mxu0 0.0
    %170 = vmatprep.subr.mxu0 0.0
    %171 = vmatpush1.msra.mxu0 0.0
    %172 = vmatprep.subr.mxu0 0.0
    %173 = vmatpush1.msra.mxu0 0.0
    %174 = vmatprep.subr.mxu0 0.0
    %175 = vmatpush1.msra.mxu0 0.0
    %176 = vmatprep.subr.mxu0 0.0
    %177 = vmatpush1.msra.mxu0 0.0
    %178 = vmatprep.subr.mxu0 0.0
    %179 = vmatpush1.msra.mxu0 0.0
    %180 = vmatprep.subr.mxu0 0.0
    %181 = vmatpush1.msra.mxu0 0.0
    %182 = vmatprep.subr.mxu0 0.0
    %183 = vmatpush1.msra.mxu0 0.0
    %184 = vmatprep.subr.mxu0 0.0
    %185 = vmatpush1.msra.mxu0 0.0
    %186 = vmatprep.subr.mxu0 0.0
    %187 = vmatpush1.msra.mxu0 0.0
    %188 = vmatprep.subr.mxu0 0.0
    %189 = vmatpush1.msra.mxu0 0.0
    %190 = vmatprep.mubr.f32.mxu0 0.0
    %191 = vmatmul.mubr.f32.gmra.mrb[0].mxu0 %v53
    %v192 = vpop.f32.mrb[0].mxu0
    %v193 = vadd.f32 0.0, %v192
    %v194 = vpop.f32.mrb[0].mxu0
    %195 = vdwg.mxu0
    %v196 = vmul.f32 %v122, 14.285714
    %v197 = vmul.f32 %v124, 14.285714
    %v198 = vmul.f32 %v193, 14.285714
    %199 = vst [vmem:[#allocation7] sm:$0xff] %v196
    %200 = vst [vmem:[#allocation7 + $0x8] sm:$0xff] %v197
    %vm201 = vcmask 523264
    %202 = vst.msk [vmem:[#allocation7 + $0x10] sm:$0xff] %vm201, %v198
    // Predicated region
    $region18: #{_forward_jit.1} parent=1 // pred_check
      _
    $region19: #{_forward_jit.1} parent=1 // pred_check_branch
      %204 = sbr.rel (0) target = $region21
    $region20: #{_forward_jit.1} parent=1 // pred_region
      %s206 = ssub.s32 384, 384
      %207 = vsyncadd [#allocation4], %s206
      %s209 = sshll.u32 [#allocation7], 4
      %s210 = int_to_ptr.vmem [resolvable:$true] %s209
      %212 = dma.vmem_to_hbm [thread:$0]  %s210, 384, %s2, [#allocation4]
    $region21: #{_forward_jit.1} parent=1 // pred_fallthru
      _
    // Predicated region
    $region22: #{_forward_jit.1} parent=1 // pred_check
      _
    $region23: #{_forward_jit.1} parent=1 // pred_check_branch
      %214 = sbr.rel (0) target = $region25
    $region24: #{_forward_jit.1} parent=1 // pred_region
      %215 = dma.done [#allocation4], 384
    $region25: #{_forward_jit.1} parent=1 // pred_fallthru
      _
    %216 = vsyncpa [#allocation3], 1
    %217 = vsyncpa [#allocation6], 1
    %218 = vsyncpa [#allocation4], 1

</llo_original>
